<compile_context>
chip_gen: v7x
topology: tpu7x:2x2x1
jax: 0.10.0
libtpu: 0.0.40
codegen_flags: <defaults>
</compile_context>

<pallas_src>
import functools

import jax
import jax.numpy as jnp
from jax import lax
from jax.experimental import pallas as pl
from jax.experimental.pallas import tpu as pltpu


def _lsh_topk_kernel(qk_t_ref, a_ref, q_ref, o_ref, *, bucket_size):
    qk_t = qk_t_ref[0, 0]   # [D+1, S]  qk_ext transposed (wrapper)
    a = a_ref[0, 0]         # [T, D+1]  rows of the random projection for this tile
    q_row = q_ref[0, 0]     # [1, S]    Q[j] = qk_j . a_j  (precomputed in wrapper)

    # P[i, j] = a_i . qk_j  -> plain [T,K] x [K,S] MXU matmul.
    p = jnp.dot(a, qk_t, preferred_element_type=jnp.float32)      # [T, S]
    scores = p * q_row                                            # Q[j] * (a_i . qk_j)
    scores = jnp.where(scores != scores, 0.0, scores)             # result[result != result] = 0

    t, s = scores.shape
    jrow = lax.broadcasted_iota(jnp.int32, (t, s), 1).astype(jnp.float32)
    neg_inf = jnp.float32(-jnp.inf)
    big_idx = jnp.float32(s)

    # `bucket_size` steps of row-max selection; ties broken towards the lowest
    # column index (torch.topk's tie order is unspecified).  Each step removes
    # exactly one column per row, so exactly `bucket_size` entries per row end
    # up at 0.0.
    def body(_, carry):
        sc, acc = carry
        m = jnp.max(sc, axis=-1, keepdims=True)                   # [T,1]  XLU reduce
        cand = jnp.where(sc == m, jrow, big_idx)                  # candidate col indices
        win_idx = jnp.min(cand, axis=-1, keepdims=True)           # [T,1]  XLU reduce
        win = jrow == win_idx                                     # one-hot winner / row
        return jnp.where(win, neg_inf, sc), jnp.where(win, 0.0, acc)

    _, out = lax.fori_loop(
        0, bucket_size, body,
        (scores, jnp.full((t, s), -10000.0, dtype=jnp.float32)))

    o_ref[0, 0] = out.astype(o_ref.dtype)                         # single full-tile store


def _pick_row_tile(S, budget_bytes=24 << 20):
    # ~7 f32 [T, S] arrays live at peak (double-buffered output block, the two
    # loop carries, temporaries); keep that under `budget_bytes` on every chip
    # generation while preferring the largest tile that divides S.
    if S <= 512 and 7 * S * S * 4 <= budget_bytes:
        return S
    for t in (512, 256, 128, 64, 32, 16, 8):
        if S % t == 0 and 7 * t * S * 4 <= budget_bytes:
            return t
    return 8 if S % 8 == 0 else S


def simple_lsh_attention(qk, key, bucket_size=32):
    B, H, S, D = qk.shape
    assert 1 <= bucket_size <= S
    qk = qk.astype(jnp.float32)

    # Prologue identical to the PyTorch module; the (D+1)-th coordinate is
    # sqrt(1 - ||qk_norm||^2) (≈0 or NaN from rounding).  NaNs are scrubbed
    # in-kernel, matching `result[result != result] = 0`.
    qk_norm = qk / jnp.linalg.norm(qk, axis=-1, keepdims=True)
    qk_const = jnp.linalg.norm(qk_norm, axis=-1, keepdims=True)
    qk_const = jnp.sqrt(1.0 - qk_const ** 2)
    qk_ext = jnp.concatenate([qk, qk_const], axis=-1)              # [B, H, S, D+1]
    a = jax.random.normal(key, (B, H, S, D + 1), dtype=jnp.float32)

    # Q[j] = qk_j . a_j  (computed here, O(S*D), instead of diag(P) in-kernel).
    q_row = jnp.sum(qk_ext * a, axis=-1)[:, :, None, :]            # [B, H, 1, S]
    # Pre-transpose so the in-kernel contraction is [T,K] x [K,S].
    qk_t = jnp.swapaxes(qk_ext, -1, -2)                            # [B, H, D+1, S]

    D1 = D + 1
    T = _pick_row_tile(S)
    assert S % T == 0

    # Conservative live-set estimate: double-buffered blocks + in-kernel temps.
    vmem_est = (2 * T * S * 4 + 2 * D1 * S * 4 + 2 * T * D1 * 4 + 2 * S * 4
                + 5 * T * S * 4)
    vmem_limit = int(min(max(vmem_est + (8 << 20), 32 << 20), 64 << 20))

    kernel = functools.partial(_lsh_topk_kernel, bucket_size=bucket_size)
    return pl.pallas_call(
        kernel,
        out_shape=jax.ShapeDtypeStruct((B, H, S, S), jnp.float32),
        grid_spec=pltpu.PrefetchScalarGridSpec(
            num_scalar_prefetch=0,
            grid=(B, H, S // T),
            in_specs=[
                pl.BlockSpec((1, 1, D1, S), lambda b, h, it: (b, h, 0, 0)),   # qk^T (full)
                pl.BlockSpec((1, 1, T, D1), lambda b, h, it: (b, h, it, 0)),  # a (row tile)
                pl.BlockSpec((1, 1, 1, S), lambda b, h, it: (b, h, 0, 0)),    # Q row
            ],
            out_specs=pl.BlockSpec((1, 1, T, S), lambda b, h, it: (b, h, it, 0)),
        ),
        compiler_params=pltpu.CompilerParams(
            dimension_semantics=("parallel", "parallel", "parallel"),
            vmem_limit_bytes=vmem_limit),
    )(qk_t, a, q_row)


def _reference(qk, key, bucket_size):
    # Pure-JAX reference of the module's forward (same deterministic `a`).
    qk = qk.astype(jnp.float32)
    qk_norm = qk / jnp.linalg.norm(qk, axis=-1, keepdims=True)
    qk_const = jnp.sqrt(1.0 - jnp.linalg.norm(qk_norm, axis=-1, keepdims=True) ** 2)
    qk_ext = jnp.concatenate([qk, qk_const], axis=-1)
    a = jax.random.normal(key, qk_ext.shape, dtype=jnp.float32)
    q = jnp.sum(qk_ext * a, axis=-1)                               # [B, H, S]
    p = jnp.einsum("bhid,bhjd->bhij", a, qk_ext)                   # a_i . qk_j
    scores = q[:, :, None, :] * p
    scores = jnp.where(jnp.isnan(scores), 0.0, scores)
    _, idx = lax.top_k(scores, bucket_size)                        # [B, H, S, k]
    sel = jnp.sum(jax.nn.one_hot(idx, scores.shape[-1], dtype=jnp.float32), axis=-2) > 0
    return jnp.where(sel, 0.0, -10000.0)


if __name__ == "__main__":
    B, H, S, D = 2, 2, 128, 32
    bucket_size = 32

    key = jax.random.PRNGKey(0)
    k_qk, k_a = jax.random.split(key)
    qk = jax.random.normal(k_qk, (B, H, S, D), dtype=jnp.float32)

    out = simple_lsh_attention(qk, k_a, bucket_size=bucket_size)
    out = jax.block_until_ready(out)

    # Structural checks: exactly `bucket_size` zeros per row, everything else -10000.
    assert out.shape == (B, H, S, S)
    assert out.dtype == jnp.float32
    zeros_per_row = jnp.sum(out == 0.0, axis=-1)
    assert bool(jnp.all(zeros_per_row == bucket_size))
    assert bool(jnp.all(jnp.logical_or(out == 0.0, out == -10000.0)))

    # Reference agreement (tolerant: the kernel's MXU matmul and the XLA einsum
    # round differently, which can swap near-tied scores across the top-k
    # boundary; a genuinely wrong mask would agree on only ~60-70% of entries).
    ref = _reference(qk, k_a, bucket_size)
    agree = float(jnp.mean((out == ref).astype(jnp.float32)))
    assert agree > 0.97, agree

    print("KERNEL_OK")
</pallas_src>

<mosaic_0001>
module attributes {stable_mosaic.version = 11 : i64} {
  func.func @_lsh_topk_kernel(%arg0: i32, %arg1: i32, %arg2: i32, %arg3: memref<1x1x33x128xf32, #tpu.memory_space<vmem>>, %arg4: memref<1x1x128x33xf32, #tpu.memory_space<vmem>>, %arg5: memref<1x1x1x128xf32, #tpu.memory_space<vmem>>, %arg6: memref<1x1x128x128xf32, #tpu.memory_space<vmem>>) attributes {dimension_semantics = [#tpu.dimension_semantics<parallel>, #tpu.dimension_semantics<parallel>, #tpu.dimension_semantics<parallel>], iteration_bounds = array<i64: 2, 2, 1>, scalar_prefetch = 0 : i64, scratch_operands = 0 : i64, tpu.core_type = #tpu.core_type<tc>, window_params = [{transform_indices = @transform_0, window_bounds = array<i64: 1, 1, 33, 128>}, {transform_indices = @transform_1, window_bounds = array<i64: 1, 1, 128, 33>}, {transform_indices = @transform_2, window_bounds = array<i64: 1, 1, 1, 128>}, {transform_indices = @transform_3, window_bounds = array<i64: 1, 1, 128, 128>}]} {
    %c0 = arith.constant 0 : index
    %c0_0 = arith.constant 0 : index
    %c0_1 = arith.constant 0 : index
    %c0_2 = arith.constant 0 : index
    %0 = vector.load %arg3[%c0, %c0_0, %c0_1, %c0_2] : memref<1x1x33x128xf32, #tpu.memory_space<vmem>>, vector<1x1x33x128xf32>
    %1 = vector.shape_cast %0 : vector<1x1x33x128xf32> to vector<33x128xf32>
    %c0_3 = arith.constant 0 : index
    %c0_4 = arith.constant 0 : index
    %c0_5 = arith.constant 0 : index
    %c0_6 = arith.constant 0 : index
    %2 = vector.load %arg4[%c0_3, %c0_4, %c0_5, %c0_6] : memref<1x1x128x33xf32, #tpu.memory_space<vmem>>, vector<1x1x128x33xf32>
    %3 = vector.shape_cast %2 : vector<1x1x128x33xf32> to vector<128x33xf32>
    %c0_7 = arith.constant 0 : index
    %c0_8 = arith.constant 0 : index
    %c0_9 = arith.constant 0 : index
    %c0_10 = arith.constant 0 : index
    %4 = vector.load %arg5[%c0_7, %c0_8, %c0_9, %c0_10] : memref<1x1x1x128xf32, #tpu.memory_space<vmem>>, vector<1x1x1x128xf32>
    %5 = vector.shape_cast %4 : vector<1x1x1x128xf32> to vector<1x128xf32>
    %cst = arith.constant dense<0.000000e+00> : vector<128x128xf32>
    %6 = tpu.matmul %3, %1, %cst {dimension_numbers = #tpu.dot_dimension_numbers<[1], [0], [0], [1], [0, 0, 1, 1], [], []>} : vector<128x33xf32>, vector<33x128xf32>, vector<128x128xf32> -> vector<128x128xf32>
    %7 = vector.broadcast %5 : vector<1x128xf32> to vector<128x128xf32>
    %8 = arith.mulf %6, %7 : vector<128x128xf32>
    %9 = arith.cmpf one, %8, %8 : vector<128x128xf32>
    %cst_11 = arith.constant 0.000000e+00 : f32
    %10 = vector.broadcast %cst_11 : f32 to vector<128x128xf32>
    %11 = arith.select %9, %10, %8 : vector<128x128xi1>, vector<128x128xf32>
    %12 = tpu.iota {dimensions = array<i32: 1>} : vector<128x128xi32>
    %13 = arith.sitofp %12 : vector<128x128xi32> to vector<128x128xf32>
    %cst_12 = arith.constant -1.000000e+04 : f32
    %14 = vector.broadcast %cst_12 : f32 to vector<128x128xf32>
    %cst_13 = arith.constant 1.280000e+02 : f32
    %cst_14 = arith.constant 0xFF800000 : f32
    %c0_i32 = arith.constant 0 : i32
    %c32_i32 = arith.constant 32 : i32
    %15 = arith.addi %c0_i32, %c32_i32 : i32
    %c1_i32 = arith.constant 1 : i32
    %16:2 = scf.for %arg7 = %c0_i32 to %15 step %c1_i32 iter_args(%arg8 = %11, %arg9 = %14) -> (vector<128x128xf32>, vector<128x128xf32>)  : i32 {
      %cst_19 = arith.constant dense<0xFF800000> : vector<128xf32>
      %20 = vector.multi_reduction <maximumf>, %arg8, %cst_19 [1] : vector<128x128xf32> to vector<128xf32>
      %21 = vector.shape_cast %20 : vector<128xf32> to vector<128x1xf32>
      %22 = vector.broadcast %21 : vector<128x1xf32> to vector<128x128xf32>
      %23 = arith.cmpf oeq, %arg8, %22 : vector<128x128xf32>
      %24 = vector.broadcast %cst_13 : f32 to vector<128x128xf32>
      %25 = arith.select %23, %13, %24 : vector<128x128xi1>, vector<128x128xf32>
      %cst_20 = arith.constant dense<0x7F800000> : vector<128xf32>
      %26 = vector.multi_reduction <minimumf>, %25, %cst_20 [1] : vector<128x128xf32> to vector<128xf32>
      %27 = vector.shape_cast %26 : vector<128xf32> to vector<128x1xf32>
      %28 = vector.broadcast %27 : vector<128x1xf32> to vector<128x128xf32>
      %29 = arith.cmpf oeq, %13, %28 : vector<128x128xf32>
      %30 = vector.broadcast %cst_14 : f32 to vector<128x128xf32>
      %31 = arith.select %29, %30, %arg8 : vector<128x128xi1>, vector<128x128xf32>
      %cst_21 = arith.constant 0.000000e+00 : f32
      %32 = vector.broadcast %cst_21 : f32 to vector<128x128xf32>
      %33 = arith.select %29, %32, %arg9 : vector<128x128xi1>, vector<128x128xf32>
      scf.yield %31, %33 : vector<128x128xf32>, vector<128x128xf32>
    }
    %c0_15 = arith.constant 0 : index
    %c0_16 = arith.constant 0 : index
    %c0_17 = arith.constant 0 : index
    %c0_18 = arith.constant 0 : index
    %17 = vector.load %arg6[%c0_15, %c0_16, %c0_17, %c0_18] : memref<1x1x128x128xf32, #tpu.memory_space<vmem>>, vector<1x1x128x128xf32>
    %18 = vector.shape_cast %17 : vector<1x1x128x128xf32> to vector<128x128xf32>
    %19 = vector.shape_cast %16#1 : vector<128x128xf32> to vector<1x1x128x128xf32>
    tpu.vector_store %arg6[%c0_15, %c0_16, %c0_17, %c0_18], %19 {strides = array<i32>} : memref<1x1x128x128xf32, #tpu.memory_space<vmem>>, vector<1x1x128x128xf32>,
    return
  }
  func.func @transform_0(%arg0: i32, %arg1: i32, %arg2: i32) -> (i32, i32, i32, i32) {
    %c0_i32 = arith.constant 0 : i32
    %c0_i32_0 = arith.constant 0 : i32
    %c0_i32_1 = arith.constant 0 : i32
    return %arg0, %arg1, %c0_i32, %c0_i32_0 : i32, i32, i32, i32
  }
  func.func @transform_1(%arg0: i32, %arg1: i32, %arg2: i32) -> (i32, i32, i32, i32) {
    %c0_i32 = arith.constant 0 : i32
    %c0_i32_0 = arith.constant 0 : i32
    return %arg0, %arg1, %arg2, %c0_i32 : i32, i32, i32, i32
  }
  func.func @transform_2(%arg0: i32, %arg1: i32, %arg2: i32) -> (i32, i32, i32, i32) {
    %c0_i32 = arith.constant 0 : i32
    %c0_i32_0 = arith.constant 0 : i32
    %c0_i32_1 = arith.constant 0 : i32
    return %arg0, %arg1, %c0_i32, %c0_i32_0 : i32, i32, i32, i32
  }
  func.func @transform_3(%arg0: i32, %arg1: i32, %arg2: i32) -> (i32, i32, i32, i32) {
    %c0_i32 = arith.constant 0 : i32
    %c0_i32_0 = arith.constant 0 : i32
    return %arg0, %arg1, %arg2, %c0_i32 : i32, i32, i32, i32
  }
}

</mosaic_0001>

<llo_original>
// kernel: tpu_custom_call.1
$region0: #{tpu_custom_call.1}
  #allocation0 [shape = 'u32[]', space=smem, size = 0x4, offset = 0x4, fixed_abs, tag = 'smem constant byte address 0x4 - core index']
  #allocation1 [shape = 'u32[144,128]{1,0:T(1,128)}', space=vmem, size = 0x12000, scoped, tag = 'internal scratch']
  %s0 = inlined_call_operand.vmem [shape: f32[2,2,33,128], index: 0, kind: input, shape index: {}]
  %s1 = inlined_call_operand.vmem [shape: f32[2,2,128,33], index: 1, kind: input, shape index: {}]
  %s2 = inlined_call_operand.vmem [shape: f32[2,2,1,128], index: 2, kind: input, shape index: {}]
  %s3 = inlined_call_operand.hbm [shape: f32[2,2,128,128], index: 3, kind: output, shape index: {}]
  %s4 = sld [smem:[#allocation0]]
  $region52: #{tpu_custom_call.1} parent=0
    _
  %s6 = ssub.s32 1, %s4
  %s7 = scalar_select 0, %s6, %s4
  $region1: #{tpu_custom_call.1} parent=0
    #allocation2 [shape = 'u8[131072]{0}', space=vmem, size = 0x20000, scoped, tag = 'output window, operand 0']
    #allocation3 [shape = 's32[2]{0}', space=sflag, size = 0x8, scoped, tag = 'scoped memory for tpu_custom_call.1']
    %8 = vsyncpa [#allocation3], 0
    %s9 = scalar_lea.sflag [#allocation3], 1
    %10 = vsyncpa %s9, 0
    loop: start=0, step=1, limit=6
    $region2: #{tpu_custom_call.1} parent=1 // loop_pre_header
      _
    $region3: #{tpu_custom_call.1} parent=1 // loop_header
      %s12 = sphi 0, %s16
      %p13 = scmp.ge.s32.totalorder %s12, 6
      %s19 = sphi 0, %s38
      %s20 = sphi 0, %s34
      %s21 = sphi 0, %s30
      %s22 = sphi 0, %s19
      %s23 = sphi 0, %s20
      %s24 = sphi 0, %s21
      %s25 = sphi 0, %s22
      %s26 = sphi 0, %s23
      %s27 = sphi 0, %s24
      %s43 = sphi 0, %s45
      %s46 = sphi 0, %s43
      %s47 = sphi 0, %s46
      %s63 = sphi 0, %s47
      %s73 = sphi 0, %s75
      %s76 = sphi 0, %s73
      %s77 = sphi 0, %s76
      %s93 = sphi 0, %s77
      %s101 = sphi 0, %s103
      %s104 = sphi 0, %s101
      %s105 = sphi 0, %s104
      %s121 = sphi 0, %s105
      %s131 = sphi 0, %s133
      %s134 = sphi 0, %s131
      %s135 = sphi 0, %s134
      %s151 = sphi 0, %s135
    $region4: #{tpu_custom_call.1} parent=1 // loop_header_branch
      %15 = sbr.rel (%p13) target = $region8
    $region5: #{tpu_custom_call.1} parent=1 // loop_body
      %s17 = ssub.s32 %s12, 1
      %s18 = ssub.s32 %s12, 2
      %s28 = sadd.s32 1, %s21
      %p29 = scmp.ge.s32.totalorder %s28, 1
      %s30 = scalar_select %p29, 0, %s28
      %s31 = sadd.s32 1, %s20
      %s32 = scalar_select %p29, %s31, %s20
      %p33 = scmp.ge.s32.totalorder %s32, 2
      %s34 = scalar_select %p33, 0, %s32
      %s35 = sadd.s32 1, %s19
      %s36 = scalar_select %p33, %s35, %s19
      %p37 = scmp.ge.s32.totalorder %s36, 2
      %s38 = scalar_select %p37, 0, %s36
      %s39 = ssub.s32 %s19, %s38
      %s40 = ssub.s32 %s20, %s34
      %s41 = sor.u32 %s39, %s40
      %p42 = scmp.eq.s32.totalorder %s41, 0
      %s44 = sadd.s32 %s43, 1
      %s45 = scalar_select %p42, %s43, %s44
      %p48 = pneg %p42
      %p49 = scmp.eq.s32.totalorder %s12, 3
      %p50 = por %p48, %p49
      %p51 = scmp.ne.s32.totalorder %s43, %s46
      %p52 = scmp.eq.s32.totalorder %s12, 0
      %p53 = por %p51, %p52
      %p54 = scmp.ne.s32.totalorder %s43, %s46
      %p55 = scmp.eq.s32.totalorder %s17, 3
      %p56 = por %p54, %p55
      %p57 = scmp.ne.s32.totalorder %s46, %s47
      %p58 = scmp.eq.s32.totalorder %s17, 0
      %p59 = por %p57, %p58
      %p60 = scmp.ne.s32.totalorder %s46, %s47
      %p61 = scmp.eq.s32.totalorder %s18, 3
      %p62 = por %p60, %p61
      %p64 = scmp.ne.s32.totalorder %s47, %s63
      %p65 = scmp.eq.s32.totalorder %s18, 0
      %p66 = por %p64, %p65
      %s67 = ssub.s32 %s19, %s38
      %s68 = ssub.s32 %s20, %s34
      %s69 = sor.u32 %s67, %s68
      %s70 = ssub.s32 %s21, %s30
      %s71 = sor.u32 %s69, %s70
      %p72 = scmp.eq.s32.totalorder %s71, 0
      %s74 = sadd.s32 %s73, 1
      %s75 = scalar_select %p72, %s73, %s74
      %p78 = pneg %p72
      %p79 = scmp.eq.s32.totalorder %s12, 3
      %p80 = por %p78, %p79
      %p81 = scmp.ne.s32.totalorder %s73, %s76
      %p82 = scmp.eq.s32.totalorder %s12, 0
      %p83 = por %p81, %p82
      %p84 = scmp.ne.s32.totalorder %s73, %s76
      %p85 = scmp.eq.s32.totalorder %s17, 3
      %p86 = por %p84, %p85
      %p87 = scmp.ne.s32.totalorder %s76, %s77
      %p88 = scmp.eq.s32.totalorder %s17, 0
      %p89 = por %p87, %p88
      %p90 = scmp.ne.s32.totalorder %s76, %s77
      %p91 = scmp.eq.s32.totalorder %s18, 3
      %p92 = por %p90, %p91
      %p94 = scmp.ne.s32.totalorder %s77, %s93
      %p95 = scmp.eq.s32.totalorder %s18, 0
      %p96 = por %p94, %p95
      %s97 = ssub.s32 %s19, %s38
      %s98 = ssub.s32 %s20, %s34
      %s99 = sor.u32 %s97, %s98
      %p100 = scmp.eq.s32.totalorder %s99, 0
      %s102 = sadd.s32 %s101, 1
      %s103 = scalar_select %p100, %s101, %s102
      %p106 = pneg %p100
      %p107 = scmp.eq.s32.totalorder %s12, 3
      %p108 = por %p106, %p107
      %p109 = scmp.ne.s32.totalorder %s101, %s104
      %p110 = scmp.eq.s32.totalorder %s12, 0
      %p111 = por %p109, %p110
      %p112 = scmp.ne.s32.totalorder %s101, %s104
      %p113 = scmp.eq.s32.totalorder %s17, 3
      %p114 = por %p112, %p113
      %p115 = scmp.ne.s32.totalorder %s104, %s105
      %p116 = scmp.eq.s32.totalorder %s17, 0
      %p117 = por %p115, %p116
      %p118 = scmp.ne.s32.totalorder %s104, %s105
      %p119 = scmp.eq.s32.totalorder %s18, 3
      %p120 = por %p118, %p119
      %p122 = scmp.ne.s32.totalorder %s105, %s121
      %p123 = scmp.eq.s32.totalorder %s18, 0
      %p124 = por %p122, %p123
      %s125 = ssub.s32 %s19, %s38
      %s126 = ssub.s32 %s20, %s34
      %s127 = sor.u32 %s125, %s126
      %s128 = ssub.s32 %s21, %s30
      %s129 = sor.u32 %s127, %s128
      %p130 = scmp.eq.s32.totalorder %s129, 0
      %s132 = sadd.s32 %s131, 1
      %s133 = scalar_select %p130, %s131, %s132
      %p136 = pneg %p130
      %p137 = scmp.eq.s32.totalorder %s12, 3
      %p138 = por %p136, %p137
      %p139 = scmp.ne.s32.totalorder %s131, %s134
      %p140 = scmp.eq.s32.totalorder %s12, 0
      %p141 = por %p139, %p140
      %p142 = scmp.ne.s32.totalorder %s131, %s134
      %p143 = scmp.eq.s32.totalorder %s17, 3
      %p144 = por %p142, %p143
      %p145 = scmp.ne.s32.totalorder %s134, %s135
      %p146 = scmp.eq.s32.totalorder %s17, 0
      %p147 = por %p145, %p146
      %p148 = scmp.ne.s32.totalorder %s134, %s135
      %p149 = scmp.eq.s32.totalorder %s18, 3
      %p150 = por %p148, %p149
      %p152 = scmp.ne.s32.totalorder %s135, %s151
      %p153 = scmp.eq.s32.totalorder %s18, 0
      %p154 = por %p152, %p153
      %p155 = scmp.le.s32.totalorder 1, %s12
      %p156 = scmp.lt.s32.totalorder %s12, 5
      %p157 = pnand %p155, %p156
      %p158 = pneg %p157
      // Predicated region
      $region9: #{tpu_custom_call.1} parent=5 // pred_check
        _
      $region10: #{tpu_custom_call.1} parent=5 // pred_check_branch
        %160 = sbr.rel (%p157) target = $region12
      $region11: #{tpu_custom_call.1} parent=5 // pred_region
        %s161 = ssub.s32 %s12, 1
      $region12: #{tpu_custom_call.1} parent=5 // pred_fallthru
        _
      %p162 = scmp.lt.s32.totalorder %s12, 4
      // Predicated region
      $region13: #{tpu_custom_call.1} parent=5 // pred_check
        %p163 = pneg %p162
      $region14: #{tpu_custom_call.1} parent=5 // pred_check_branch
        %165 = sbr.rel (%p163) target = $region16
      $region15: #{tpu_custom_call.1} parent=5 // pred_region
        // Predicated region
        $region17: #{tpu_custom_call.1} parent=15 // pred_check
          %p166 = pneg %p53
        $region18: #{tpu_custom_call.1} parent=15 // pred_check_branch
          %168 = sbr.rel (%p166) target = $region20
        $region19: #{tpu_custom_call.1} parent=15 // pred_region
          %p169 = scmp.lt.s32.totalorder %s19, 1
          %s170 = scalar_select %p169, %s19, 1
          %p171 = scmp.lt.s32.totalorder %s20, 1
          %s172 = scalar_select %p171, %s20, 1
          %s173 = smul.addr %s172, 5
          %s174 = smul.addr %s170, 10
          %s175 = sadd.s32 %s173, %s174
          %s176 = smul.addr %s175, 8
          %s177 = scalar_lea.vmem %s0, %s176
        $region20: #{tpu_custom_call.1} parent=15 // pred_fallthru
          _
        // Predicated region
        $region21: #{tpu_custom_call.1} parent=15 // pred_check
          %p178 = pneg %p83
        $region22: #{tpu_custom_call.1} parent=15 // pred_check_branch
          %180 = sbr.rel (%p178) target = $region24
        $region23: #{tpu_custom_call.1} parent=15 // pred_region
          %s181 = smul.u32 16, %s21
          %p182 = scmp.lt.s32.totalorder %s19, 1
          %s183 = scalar_select %p182, %s19, 1
          %p184 = scmp.lt.s32.totalorder %s20, 1
          %s185 = scalar_select %p184, %s20, 1
          %p186 = scmp.lt.s32.totalorder %s181, 15
          %s187 = scalar_select %p186, %s181, 15
          %s188 = smul.addr %s185, 16
          %s189 = sadd.s32 %s187, %s188
          %s190 = smul.addr %s183, 32
          %s191 = sadd.s32 %s189, %s190
          %s192 = smul.addr %s191, 8
          %s193 = scalar_lea.vmem %s1, %s192
          %s194 = smul.u32 16, %s21
        $region24: #{tpu_custom_call.1} parent=15 // pred_fallthru
          _
        // Predicated region
        $region25: #{tpu_custom_call.1} parent=15 // pred_check
          %p195 = pneg %p111
        $region26: #{tpu_custom_call.1} parent=15 // pred_check_branch
          %197 = sbr.rel (%p195) target = $region28
        $region27: #{tpu_custom_call.1} parent=15 // pred_region
          %p198 = scmp.lt.s32.totalorder %s19, 1
          %s199 = scalar_select %p198, %s19, 1
          %p200 = scmp.lt.s32.totalorder %s20, 1
          %s201 = scalar_select %p200, %s20, 1
          %s202 = smul.addr %s199, 2
          %s203 = sadd.s32 %s201, %s202
          %s204 = scalar_lea.vmem %s2, %s203
        $region28: #{tpu_custom_call.1} parent=15 // pred_fallthru
          _
      $region16: #{tpu_custom_call.1} parent=5 // pred_fallthru
        _
      %p205 = scmp.le.s32.totalorder 1, %s12
      %p206 = scmp.lt.s32.totalorder %s12, 5
      %p207 = pnand %p205, %p206
      %p208 = pneg %p207
      // Predicated region
      $region29: #{tpu_custom_call.1} parent=5 // pred_check
        _
      $region30: #{tpu_custom_call.1} parent=5 // pred_check_branch
        %210 = sbr.rel (%p207) target = $region32
      $region31: #{tpu_custom_call.1} parent=5 // pred_region
        %s211 = ssub.s32 %s12, 1
        %p212 = scmp.lt.s32.totalorder %s22, 1
        %s213 = scalar_select %p212, %s22, 1
        %p214 = scmp.lt.s32.totalorder %s23, 1
        %s215 = scalar_select %p214, %s23, 1
        %s216 = smul.addr %s215, 5
        %s217 = smul.addr %s213, 10
        %s218 = sadd.s32 %s216, %s217
        %s219 = smul.addr %s218, 8
        %s220 = scalar_lea.vmem %s0, %s219
        %p221 = pneg %p59
        %p222 = pneg %p56
        %s223 = smul.u32 16, %s24
        %p224 = scmp.lt.s32.totalorder %s22, 1
        %s225 = scalar_select %p224, %s22, 1
        %p226 = scmp.lt.s32.totalorder %s23, 1
        %s227 = scalar_select %p226, %s23, 1
        %p228 = scmp.lt.s32.totalorder %s223, 15
        %s229 = scalar_select %p228, %s223, 15
        %s230 = smul.addr %s227, 16
        %s231 = sadd.s32 %s229, %s230
        %s232 = smul.addr %s225, 32
        %s233 = sadd.s32 %s231, %s232
        %s234 = smul.addr %s233, 8
        %s235 = scalar_lea.vmem %s1, %s234
        %p236 = pneg %p89
        %p237 = pneg %p86
        %p238 = scmp.lt.s32.totalorder %s22, 1
        %s239 = scalar_select %p238, %s22, 1
        %p240 = scmp.lt.s32.totalorder %s23, 1
        %s241 = scalar_select %p240, %s23, 1
        %s242 = smul.addr %s239, 2
        %s243 = sadd.s32 %s241, %s242
        %s244 = scalar_lea.vmem %s2, %s243
        %p245 = pneg %p117
        %p246 = pneg %p114
        %p247 = pneg %p147
        %p248 = pneg %p144
        %s249 = sand.u32 %s134, 1
        %s250 = scalar_lea.sflag [#allocation3], %s249
        %s251 = sand.u32 %s134, 1
        %s252 = smul.addr %s251, 128
        %s253 = scalar_lea.vmem [#allocation2], %s252
        %p254 = scmp.lt.s32.totalorder %s22, 1
        %s255 = scalar_select %p254, %s22, 1
        %p256 = scmp.lt.s32.totalorder %s23, 1
        %s257 = scalar_select %p256, %s23, 1
        %s258 = smul.addr %s257, 5
        %s259 = smul.addr %s255, 10
        %s260 = sadd.s32 %s258, %s259
        %s261 = smul.addr %s260, 8
        %s262 = scalar_lea.vmem %s0, %s261
        %s263 = smul.u32 16, %s24
        %p264 = scmp.lt.s32.totalorder %s22, 1
        %s265 = scalar_select %p264, %s22, 1
        %p266 = scmp.lt.s32.totalorder %s23, 1
        %s267 = scalar_select %p266, %s23, 1
        %p268 = scmp.lt.s32.totalorder %s263, 15
        %s269 = scalar_select %p268, %s263, 15
        %s270 = smul.addr %s267, 16
        %s271 = sadd.s32 %s269, %s270
        %s272 = smul.addr %s265, 32
        %s273 = sadd.s32 %s271, %s272
        %s274 = smul.addr %s273, 8
        %s275 = scalar_lea.vmem %s1, %s274
        %s276 = smul.u32 16, %s24
        %p277 = scmp.lt.s32.totalorder %s22, 1
        %s278 = scalar_select %p277, %s22, 1
        %p279 = scmp.lt.s32.totalorder %s23, 1
        %s280 = scalar_select %p279, %s23, 1
        %s281 = smul.addr %s278, 2
        %s282 = sadd.s32 %s280, %s281
        %s283 = scalar_lea.vmem %s2, %s282
        %s284 = smul.u32 16, %s24
        %v285 = vld [vmem:[%s262] sm:$0xff]
        %v286 = vld [vmem:[%s262 + $0x8] sm:$0xff]
        %v287 = vld [vmem:[%s262 + $0x10] sm:$0xff]
        %v288 = vld [vmem:[%s262 + $0x18] sm:$0xff]
        %v289 = vld [vmem:[%s262 + $0x20] sm:$0x1]
        %v290 = vld [vmem:[%s275] sm:$0xff]
        %v291 = vld [vmem:[%s275 + $0x8] sm:$0xff]
        %v292 = vld [vmem:[%s275 + $0x10] sm:$0xff]
        %v293 = vld [vmem:[%s275 + $0x18] sm:$0xff]
        %v294 = vld [vmem:[%s275 + $0x20] sm:$0xff]
        %v295 = vld [vmem:[%s275 + $0x28] sm:$0xff]
        %v296 = vld [vmem:[%s275 + $0x30] sm:$0xff]
        %v297 = vld [vmem:[%s275 + $0x38] sm:$0xff]
        %v298 = vld [vmem:[%s275 + $0x40] sm:$0xff]
        %v299 = vld [vmem:[%s275 + $0x48] sm:$0xff]
        %v300 = vld [vmem:[%s275 + $0x50] sm:$0xff]
        %v301 = vld [vmem:[%s275 + $0x58] sm:$0xff]
        %v302 = vld [vmem:[%s275 + $0x60] sm:$0xff]
        %v303 = vld [vmem:[%s275 + $0x68] sm:$0xff]
        %v304 = vld [vmem:[%s275 + $0x70] sm:$0xff]
        %v305 = vld [vmem:[%s275 + $0x78] sm:$0xff]
        %v306 = vld [vmem:[%s283] sm:$0x1]
        %vm307 = vcmask 269312
        %v309 = vsel %vm307, %v290, 0
        %v312 = vsel %vm307, %v291, 0
        %v315 = vsel %vm307, %v292, 0
        %v318 = vsel %vm307, %v293, 0
        %v321 = vsel %vm307, %v294, 0
        %v324 = vsel %vm307, %v295, 0
        %v327 = vsel %vm307, %v296, 0
        %v330 = vsel %vm307, %v297, 0
        %v333 = vsel %vm307, %v298, 0
        %v336 = vsel %vm307, %v299, 0
        %v339 = vsel %vm307, %v300, 0
        %v342 = vsel %vm307, %v301, 0
        %v345 = vsel %vm307, %v302, 0
        %v348 = vsel %vm307, %v303, 0
        %v351 = vsel %vm307, %v304, 0
        %v354 = vsel %vm307, %v305, 0
        %vm356 = vcmask 1040384
        %v358 = vsel %vm356, %v289, 0
        %360 = vmatprep.subr.mxu0 0.0
        %361 = vmatpush1.msra.mxu0 %v285
        %362 = vmatprep.subr.mxu0 0.0
        %363 = vmatpush1.msra.mxu0 %v286
        %364 = vmatprep.subr.mxu0 0.0
        %365 = vmatpush1.msra.mxu0 %v287
        %366 = vmatprep.subr.mxu0 0.0
        %367 = vmatpush1.msra.mxu0 %v288
        %368 = vmatprep.subr.mxu0 0.0
        %369 = vmatpush1.msra.mxu0 %v358
        %370 = vmatprep.subr.mxu0 0.0
        %371 = vmatpush1.msra.mxu0 0.0
        %372 = vmatprep.subr.mxu0 0.0
        %373 = vmatpush1.msra.mxu0 0.0
        %374 = vmatprep.subr.mxu0 0.0
        %375 = vmatpush1.msra.mxu0 0.0
        %376 = vmatprep.subr.mxu0 0.0
        %377 = vmatpush1.msra.mxu0 0.0
        %378 = vmatprep.subr.mxu0 0.0
        %379 = vmatpush1.msra.mxu0 0.0
        %380 = vmatprep.subr.mxu0 0.0
        %381 = vmatpush1.msra.mxu0 0.0
        %382 = vmatprep.subr.mxu0 0.0
        %383 = vmatpush1.msra.mxu0 0.0
        %384 = vmatprep.subr.mxu0 0.0
        %385 = vmatpush1.msra.mxu0 0.0
        %386 = vmatprep.subr.mxu0 0.0
        %387 = vmatpush1.msra.mxu0 0.0
        %388 = vmatprep.subr.mxu0 0.0
        %389 = vmatpush1.msra.mxu0 0.0
        %390 = vmatprep.subr.mxu0 0.0
        %391 = vmatpush1.msra.mxu0 0.0
        %392 = vmatprep.subr.mxu0 0.0
        %393 = vmatpush1.msra.mxu0 0.0
        %394 = vmatprep.subr.mxu0 0.0
        %395 = vmatpush1.msra.mxu0 0.0
        %396 = vmatprep.subr.mxu0 0.0
        %397 = vmatpush1.msra.mxu0 0.0
        %398 = vmatprep.subr.mxu0 0.0
        %399 = vmatpush1.msra.mxu0 0.0
        %400 = vmatprep.subr.mxu0 0.0
        %401 = vmatpush1.msra.mxu0 0.0
        %402 = vmatprep.subr.mxu0 0.0
        %403 = vmatpush1.msra.mxu0 0.0
        %404 = vmatprep.subr.mxu0 0.0
        %405 = vmatpush1.msra.mxu0 0.0
        %406 = vmatprep.subr.mxu0 0.0
        %407 = vmatpush1.msra.mxu0 0.0
        %408 = vmatprep.subr.mxu0 0.0
        %409 = vmatpush1.msra.mxu0 0.0
        %410 = vmatprep.subr.mxu0 0.0
        %411 = vmatpush1.msra.mxu0 0.0
        %412 = vmatprep.subr.mxu0 0.0
        %413 = vmatpush1.msra.mxu0 0.0
        %414 = vmatprep.subr.mxu0 0.0
        %415 = vmatpush1.msra.mxu0 0.0
        %416 = vmatprep.subr.mxu0 0.0
        %417 = vmatpush1.msra.mxu0 0.0
        %418 = vmatprep.subr.mxu0 0.0
        %419 = vmatpush1.msra.mxu0 0.0
        %420 = vmatprep.subr.mxu0 0.0
        %421 = vmatpush1.msra.mxu0 0.0
        %422 = vmatprep.subr.mxu0 0.0
        %423 = vmatpush1.msra.mxu0 0.0
        %424 = vmatprep.mubr.f32.mxu0 0.0
        %425 = vmatmul.mubr.f32.gmra.mrb[0].mxu0 %v309
        %v426 = vpop.f32.mrb[0].mxu0
        %v427 = vadd.f32 0.0, %v426
        %v428 = vpop.f32.mrb[0].mxu0
        %429 = vmatprep.mubr.f32.mxu0 0.0
        %430 = vmatmul.mubr.f32.gmra.mrb[0].mxu0 %v312
        %v431 = vpop.f32.mrb[0].mxu0
        %v432 = vadd.f32 0.0, %v431
        %v433 = vpop.f32.mrb[0].mxu0
        %434 = vmatprep.mubr.f32.mxu0 0.0
        %435 = vmatmul.mubr.f32.gmra.mrb[0].mxu0 %v315
        %v436 = vpop.f32.mrb[0].mxu0
        %v437 = vadd.f32 0.0, %v436
        %v438 = vpop.f32.mrb[0].mxu0
        %439 = vmatprep.mubr.f32.mxu0 0.0
        %440 = vmatmul.mubr.f32.gmra.mrb[0].mxu0 %v318
        %v441 = vpop.f32.mrb[0].mxu0
        %v442 = vadd.f32 0.0, %v441
        %v443 = vpop.f32.mrb[0].mxu0
        %444 = vmatprep.mubr.f32.mxu0 0.0
        %445 = vmatmul.mubr.f32.gmra.mrb[0].mxu0 %v321
        %v446 = vpop.f32.mrb[0].mxu0
        %v447 = vadd.f32 0.0, %v446
        %v448 = vpop.f32.mrb[0].mxu0
        %449 = vmatprep.mubr.f32.mxu0 0.0
        %450 = vmatmul.mubr.f32.gmra.mrb[0].mxu0 %v324
        %v451 = vpop.f32.mrb[0].mxu0
        %v452 = vadd.f32 0.0, %v451
        %v453 = vpop.f32.mrb[0].mxu0
        %454 = vmatprep.mubr.f32.mxu0 0.0
        %455 = vmatmul.mubr.f32.gmra.mrb[0].mxu0 %v327
        %v456 = vpop.f32.mrb[0].mxu0
        %v457 = vadd.f32 0.0, %v456
        %v458 = vpop.f32.mrb[0].mxu0
        %459 = vmatprep.mubr.f32.mxu0 0.0
        %460 = vmatmul.mubr.f32.gmra.mrb[0].mxu0 %v330
        %v461 = vpop.f32.mrb[0].mxu0
        %v462 = vadd.f32 0.0, %v461
        %v463 = vpop.f32.mrb[0].mxu0
        %464 = vmatprep.mubr.f32.mxu0 0.0
        %465 = vmatmul.mubr.f32.gmra.mrb[0].mxu0 %v333
        %v466 = vpop.f32.mrb[0].mxu0
        %v467 = vadd.f32 0.0, %v466
        %v468 = vpop.f32.mrb[0].mxu0
        %469 = vmatprep.mubr.f32.mxu0 0.0
        %470 = vmatmul.mubr.f32.gmra.mrb[0].mxu0 %v336
        %v471 = vpop.f32.mrb[0].mxu0
        %v472 = vadd.f32 0.0, %v471
        %v473 = vpop.f32.mrb[0].mxu0
        %474 = vmatprep.mubr.f32.mxu0 0.0
        %475 = vmatmul.mubr.f32.gmra.mrb[0].mxu0 %v339
        %v476 = vpop.f32.mrb[0].mxu0
        %v477 = vadd.f32 0.0, %v476
        %v478 = vpop.f32.mrb[0].mxu0
        %479 = vmatprep.mubr.f32.mxu0 0.0
        %480 = vmatmul.mubr.f32.gmra.mrb[0].mxu0 %v342
        %v481 = vpop.f32.mrb[0].mxu0
        %v482 = vadd.f32 0.0, %v481
        %v483 = vpop.f32.mrb[0].mxu0
        %484 = vmatprep.mubr.f32.mxu0 0.0
        %485 = vmatmul.mubr.f32.gmra.mrb[0].mxu0 %v345
        %v486 = vpop.f32.mrb[0].mxu0
        %v487 = vadd.f32 0.0, %v486
        %v488 = vpop.f32.mrb[0].mxu0
        %489 = vmatprep.mubr.f32.mxu0 0.0
        %490 = vmatmul.mubr.f32.gmra.mrb[0].mxu0 %v348
        %v491 = vpop.f32.mrb[0].mxu0
        %v492 = vadd.f32 0.0, %v491
        %v493 = vpop.f32.mrb[0].mxu0
        %494 = vmatprep.mubr.f32.mxu0 0.0
        %495 = vmatmul.mubr.f32.gmra.mrb[0].mxu0 %v351
        %v496 = vpop.f32.mrb[0].mxu0
        %v497 = vadd.f32 0.0, %v496
        %v498 = vpop.f32.mrb[0].mxu0
        %499 = vmatprep.mubr.f32.mxu0 0.0
        %500 = vmatmul.mubr.f32.gmra.mrb[0].mxu0 %v354
        %v501 = vpop.f32.mrb[0].mxu0
        %v502 = vadd.f32 0.0, %v501
        %v503 = vpop.f32.mrb[0].mxu0
        %504 = vdwg.mxu0
        %v506 = vlaneseq
        %v507 = vshrl.u32 %v506, 7
        %v508 = vsub.s32 0, %v507
        %v509 = vrot.slane %v306, %v508
        %v511 = vmul.f32 %v427, %v509
        %v512 = vmul.f32 %v432, %v509
        %v513 = vmul.f32 %v437, %v509
        %v514 = vmul.f32 %v442, %v509
        %v515 = vmul.f32 %v447, %v509
        %v516 = vmul.f32 %v452, %v509
        %v517 = vmul.f32 %v457, %v509
        %v518 = vmul.f32 %v462, %v509
        %v519 = vmul.f32 %v467, %v509
        %v520 = vmul.f32 %v472, %v509
        %v521 = vmul.f32 %v477, %v509
        %v522 = vmul.f32 %v482, %v509
        %v523 = vmul.f32 %v487, %v509
        %v524 = vmul.f32 %v492, %v509
        %v525 = vmul.f32 %v497, %v509
        %v526 = vmul.f32 %v502, %v509
        %vm527 = vcmp.ne.f32.partialorder %v511, %v511
        %vm528 = vcmp.ne.f32.partialorder %v512, %v512
        %vm529 = vcmp.ne.f32.partialorder %v513, %v513
        %vm530 = vcmp.ne.f32.partialorder %v514, %v514
        %vm531 = vcmp.ne.f32.partialorder %v515, %v515
        %vm532 = vcmp.ne.f32.partialorder %v516, %v516
        %vm533 = vcmp.ne.f32.partialorder %v517, %v517
        %vm534 = vcmp.ne.f32.partialorder %v518, %v518
        %vm535 = vcmp.ne.f32.partialorder %v519, %v519
        %vm536 = vcmp.ne.f32.partialorder %v520, %v520
        %vm537 = vcmp.ne.f32.partialorder %v521, %v521
        %vm538 = vcmp.ne.f32.partialorder %v522, %v522
        %vm539 = vcmp.ne.f32.partialorder %v523, %v523
        %vm540 = vcmp.ne.f32.partialorder %v524, %v524
        %vm541 = vcmp.ne.f32.partialorder %v525, %v525
        %vm542 = vcmp.ne.f32.partialorder %v526, %v526
        %v543 = vsel %vm527, 0.0, %v511
        %v544 = vsel %vm528, 0.0, %v512
        %v545 = vsel %vm529, 0.0, %v513
        %v546 = vsel %vm530, 0.0, %v514
        %v547 = vsel %vm531, 0.0, %v515
        %v548 = vsel %vm532, 0.0, %v516
        %v549 = vsel %vm533, 0.0, %v517
        %v550 = vsel %vm534, 0.0, %v518
        %v551 = vsel %vm535, 0.0, %v519
        %v552 = vsel %vm536, 0.0, %v520
        %v553 = vsel %vm537, 0.0, %v521
        %v554 = vsel %vm538, 0.0, %v522
        %v555 = vsel %vm539, 0.0, %v523
        %v556 = vsel %vm540, 0.0, %v524
        %v557 = vsel %vm541, 0.0, %v525
        %v558 = vsel %vm542, 0.0, %v526
        %v559 = vlaneseq
        %v560 = vand.u32 %v559, 127
        %v561 = vcvt.s32.f32 %v560
        loop: start=0, step=1, limit=32
        $region33: #{tpu_custom_call.1} parent=31 // loop_pre_header
          _
        $region34: #{tpu_custom_call.1} parent=31 // loop_header
          %s563 = sphi 0, %s567
          %p564 = scmp.ge.s32.totalorder %s563, 32
          %v568 = vphi %v543, %v712
          %v569 = vphi %v544, %v713
          %v570 = vphi %v545, %v714
          %v571 = vphi %v546, %v715
          %v572 = vphi %v547, %v716
          %v573 = vphi %v548, %v717
          %v574 = vphi %v549, %v718
          %v575 = vphi %v550, %v719
          %v576 = vphi %v551, %v720
          %v577 = vphi %v552, %v721
          %v578 = vphi %v553, %v722
          %v579 = vphi %v554, %v723
          %v580 = vphi %v555, %v724
          %v581 = vphi %v556, %v725
          %v582 = vphi %v557, %v726
          %v583 = vphi %v558, %v727
          %v584 = vphi -10000.0, %v728
          %v585 = vphi -10000.0, %v729
          %v586 = vphi -10000.0, %v730
          %v587 = vphi -10000.0, %v731
          %v588 = vphi -10000.0, %v732
          %v589 = vphi -10000.0, %v733
          %v590 = vphi -10000.0, %v734
          %v591 = vphi -10000.0, %v735
          %v592 = vphi -10000.0, %v736
          %v593 = vphi -10000.0, %v737
          %v594 = vphi -10000.0, %v738
          %v595 = vphi -10000.0, %v739
          %v596 = vphi -10000.0, %v740
          %v597 = vphi -10000.0, %v741
          %v598 = vphi -10000.0, %v742
          %v599 = vphi -10000.0, %v743
        $region35: #{tpu_custom_call.1} parent=31 // loop_header_branch
          %566 = sbr.rel (%p564) target = $region39
        $region36: #{tpu_custom_call.1} parent=31 // loop_body
          %600 = vmax.xlane.f32.xlu0 %v568
          %v601 = vpop.xlane.xlu0 %600
          %602 = vmax.xlane.f32.xlu0 %v569
          %v603 = vpop.xlane.xlu0 %602
          %604 = vmax.xlane.f32.xlu0 %v570
          %v605 = vpop.xlane.xlu0 %604
          %606 = vmax.xlane.f32.xlu0 %v571
          %v607 = vpop.xlane.xlu0 %606
          %608 = vmax.xlane.f32.xlu0 %v572
          %v609 = vpop.xlane.xlu0 %608
          %610 = vmax.xlane.f32.xlu0 %v573
          %v611 = vpop.xlane.xlu0 %610
          %612 = vmax.xlane.f32.xlu0 %v574
          %v613 = vpop.xlane.xlu0 %612
          %614 = vmax.xlane.f32.xlu0 %v575
          %v615 = vpop.xlane.xlu0 %614
          %616 = vmax.xlane.f32.xlu0 %v576
          %v617 = vpop.xlane.xlu0 %616
          %618 = vmax.xlane.f32.xlu0 %v577
          %v619 = vpop.xlane.xlu0 %618
          %620 = vmax.xlane.f32.xlu0 %v578
          %v621 = vpop.xlane.xlu0 %620
          %622 = vmax.xlane.f32.xlu0 %v579
          %v623 = vpop.xlane.xlu0 %622
          %624 = vmax.xlane.f32.xlu0 %v580
          %v625 = vpop.xlane.xlu0 %624
          %626 = vmax.xlane.f32.xlu0 %v581
          %v627 = vpop.xlane.xlu0 %626
          %628 = vmax.xlane.f32.xlu0 %v582
          %v629 = vpop.xlane.xlu0 %628
          %630 = vmax.xlane.f32.xlu0 %v583
          %v631 = vpop.xlane.xlu0 %630
          %vm632 = vcmp.eq.f32.partialorder %v568, %v601
          %vm633 = vcmp.eq.f32.partialorder %v569, %v603
          %vm634 = vcmp.eq.f32.partialorder %v570, %v605
          %vm635 = vcmp.eq.f32.partialorder %v571, %v607
          %vm636 = vcmp.eq.f32.partialorder %v572, %v609
          %vm637 = vcmp.eq.f32.partialorder %v573, %v611
          %vm638 = vcmp.eq.f32.partialorder %v574, %v613
          %vm639 = vcmp.eq.f32.partialorder %v575, %v615
          %vm640 = vcmp.eq.f32.partialorder %v576, %v617
          %vm641 = vcmp.eq.f32.partialorder %v577, %v619
          %vm642 = vcmp.eq.f32.partialorder %v578, %v621
          %vm643 = vcmp.eq.f32.partialorder %v579, %v623
          %vm644 = vcmp.eq.f32.partialorder %v580, %v625
          %vm645 = vcmp.eq.f32.partialorder %v581, %v627
          %vm646 = vcmp.eq.f32.partialorder %v582, %v629
          %vm647 = vcmp.eq.f32.partialorder %v583, %v631
          %v648 = vsel %vm632, %v561, 128.0
          %v649 = vsel %vm633, %v561, 128.0
          %v650 = vsel %vm634, %v561, 128.0
          %v651 = vsel %vm635, %v561, 128.0
          %v652 = vsel %vm636, %v561, 128.0
          %v653 = vsel %vm637, %v561, 128.0
          %v654 = vsel %vm638, %v561, 128.0
          %v655 = vsel %vm639, %v561, 128.0
          %v656 = vsel %vm640, %v561, 128.0
          %v657 = vsel %vm641, %v561, 128.0
          %v658 = vsel %vm642, %v561, 128.0
          %v659 = vsel %vm643, %v561, 128.0
          %v660 = vsel %vm644, %v561, 128.0
          %v661 = vsel %vm645, %v561, 128.0
          %v662 = vsel %vm646, %v561, 128.0
          %v663 = vsel %vm647, %v561, 128.0
          %664 = vmin.xlane.f32.xlu0 %v648
          %v665 = vpop.xlane.xlu0 %664
          %666 = vmin.xlane.f32.xlu0 %v649
          %v667 = vpop.xlane.xlu0 %666
          %668 = vmin.xlane.f32.xlu0 %v650
          %v669 = vpop.xlane.xlu0 %668
          %670 = vmin.xlane.f32.xlu0 %v651
          %v671 = vpop.xlane.xlu0 %670
          %672 = vmin.xlane.f32.xlu0 %v652
          %v673 = vpop.xlane.xlu0 %672
          %674 = vmin.xlane.f32.xlu0 %v653
          %v675 = vpop.xlane.xlu0 %674
          %676 = vmin.xlane.f32.xlu0 %v654
          %v677 = vpop.xlane.xlu0 %676
          %678 = vmin.xlane.f32.xlu0 %v655
          %v679 = vpop.xlane.xlu0 %678
          %680 = vmin.xlane.f32.xlu0 %v656
          %v681 = vpop.xlane.xlu0 %680
          %682 = vmin.xlane.f32.xlu0 %v657
          %v683 = vpop.xlane.xlu0 %682
          %684 = vmin.xlane.f32.xlu0 %v658
          %v685 = vpop.xlane.xlu0 %684
          %686 = vmin.xlane.f32.xlu0 %v659
          %v687 = vpop.xlane.xlu0 %686
          %688 = vmin.xlane.f32.xlu0 %v660
          %v689 = vpop.xlane.xlu0 %688
          %690 = vmin.xlane.f32.xlu0 %v661
          %v691 = vpop.xlane.xlu0 %690
          %692 = vmin.xlane.f32.xlu0 %v662
          %v693 = vpop.xlane.xlu0 %692
          %694 = vmin.xlane.f32.xlu0 %v663
          %v695 = vpop.xlane.xlu0 %694
          %vm696 = vcmp.eq.f32.partialorder %v561, %v665
          %vm697 = vcmp.eq.f32.partialorder %v561, %v667
          %vm698 = vcmp.eq.f32.partialorder %v561, %v669
          %vm699 = vcmp.eq.f32.partialorder %v561, %v671
          %vm700 = vcmp.eq.f32.partialorder %v561, %v673
          %vm701 = vcmp.eq.f32.partialorder %v561, %v675
          %vm702 = vcmp.eq.f32.partialorder %v561, %v677
          %vm703 = vcmp.eq.f32.partialorder %v561, %v679
          %vm704 = vcmp.eq.f32.partialorder %v561, %v681
          %vm705 = vcmp.eq.f32.partialorder %v561, %v683
          %vm706 = vcmp.eq.f32.partialorder %v561, %v685
          %vm707 = vcmp.eq.f32.partialorder %v561, %v687
          %vm708 = vcmp.eq.f32.partialorder %v561, %v689
          %vm709 = vcmp.eq.f32.partialorder %v561, %v691
          %vm710 = vcmp.eq.f32.partialorder %v561, %v693
          %vm711 = vcmp.eq.f32.partialorder %v561, %v695
          %v712 = vsel %vm696, -inf, %v568
          %v713 = vsel %vm697, -inf, %v569
          %v714 = vsel %vm698, -inf, %v570
          %v715 = vsel %vm699, -inf, %v571
          %v716 = vsel %vm700, -inf, %v572
          %v717 = vsel %vm701, -inf, %v573
          %v718 = vsel %vm702, -inf, %v574
          %v719 = vsel %vm703, -inf, %v575
          %v720 = vsel %vm704, -inf, %v576
          %v721 = vsel %vm705, -inf, %v577
          %v722 = vsel %vm706, -inf, %v578
          %v723 = vsel %vm707, -inf, %v579
          %v724 = vsel %vm708, -inf, %v580
          %v725 = vsel %vm709, -inf, %v581
          %v726 = vsel %vm710, -inf, %v582
          %v727 = vsel %vm711, -inf, %v583
          %v728 = vsel %vm696, 0.0, %v584
          %v729 = vsel %vm697, 0.0, %v585
          %v730 = vsel %vm698, 0.0, %v586
          %v731 = vsel %vm699, 0.0, %v587
          %v732 = vsel %vm700, 0.0, %v588
          %v733 = vsel %vm701, 0.0, %v589
          %v734 = vsel %vm702, 0.0, %v590
          %v735 = vsel %vm703, 0.0, %v591
          %v736 = vsel %vm704, 0.0, %v592
          %v737 = vsel %vm705, 0.0, %v593
          %v738 = vsel %vm706, 0.0, %v594
          %v739 = vsel %vm707, 0.0, %v595
          %v740 = vsel %vm708, 0.0, %v596
          %v741 = vsel %vm709, 0.0, %v597
          %v742 = vsel %vm710, 0.0, %v598
          %v743 = vsel %vm711, 0.0, %v599
        $region37: #{tpu_custom_call.1} parent=31 // loop_footer
          %s567 = sadd.s32 1, %s563
        $region38: #{tpu_custom_call.1} parent=31 // loop_footer_branch
          %562 = sbr.rel target = $region34
        $region39: #{tpu_custom_call.1} parent=31 // loop_exit
          _
        %744 = vst [vmem:[%s253] sm:$0xff] %v584
        %745 = vst [vmem:[%s253 + $0x8] sm:$0xff] %v585
        %746 = vst [vmem:[%s253 + $0x10] sm:$0xff] %v586
        %747 = vst [vmem:[%s253 + $0x18] sm:$0xff] %v587
        %748 = vst [vmem:[%s253 + $0x20] sm:$0xff] %v588
        %749 = vst [vmem:[%s253 + $0x28] sm:$0xff] %v589
        %750 = vst [vmem:[%s253 + $0x30] sm:$0xff] %v590
        %751 = vst [vmem:[%s253 + $0x38] sm:$0xff] %v591
        %752 = vst [vmem:[%s253 + $0x40] sm:$0xff] %v592
        %753 = vst [vmem:[%s253 + $0x48] sm:$0xff] %v593
        %754 = vst [vmem:[%s253 + $0x50] sm:$0xff] %v594
        %755 = vst [vmem:[%s253 + $0x58] sm:$0xff] %v595
        %756 = vst [vmem:[%s253 + $0x60] sm:$0xff] %v596
        %757 = vst [vmem:[%s253 + $0x68] sm:$0xff] %v597
        %758 = vst [vmem:[%s253 + $0x70] sm:$0xff] %v598
        %759 = vst [vmem:[%s253 + $0x78] sm:$0xff] %v599
        %s760 = sand.u32 %s134, 1
        %s761 = scalar_lea.sflag [#allocation3], %s760
        %s762 = sand.u32 %s134, 1
        %s763 = smul.addr %s762, 128
        %s764 = scalar_lea.vmem [#allocation2], %s763
        // Predicated region
        $region40: #{tpu_custom_call.1} parent=31 // pred_check
          %p765 = pneg %p144
        $region41: #{tpu_custom_call.1} parent=31 // pred_check_branch
          %767 = sbr.rel (%p765) target = $region43
        $region42: #{tpu_custom_call.1} parent=31 // pred_region
          %s768 = smul.u32 16, %s24
          %s770 = ssub.s32 2048, 2048
          %771 = vsyncadd %s761, %s770
          %s772 = smul.addr %s23, 16
          %s773 = sadd.s32 %s768, %s772
          %s774 = smul.addr %s22, 32
          %s775 = sadd.s32 %s773, %s774
          %s776 = smul.addr %s775, 128
          %s777 = scalar_lea.hbm %s3, %s776
          %s778 = sshll.u32 %s764, 4
          %s779 = int_to_ptr.vmem [resolvable:$true] %s778
          %784 = dma.vmem_to_hbm [thread:$0]  %s779, 2048, %s777, %s761, 128, 128, 8
        $region43: #{tpu_custom_call.1} parent=31 // pred_fallthru
          _
      $region32: #{tpu_custom_call.1} parent=5 // pred_fallthru
        _
      %p785 = scmp.le.s32.totalorder 2, %s12
      // Predicated region
      $region44: #{tpu_custom_call.1} parent=5 // pred_check
        %p786 = pneg %p785
      $region45: #{tpu_custom_call.1} parent=5 // pred_check_branch
        %788 = sbr.rel (%p786) target = $region47
      $region46: #{tpu_custom_call.1} parent=5 // pred_region
        %s789 = ssub.s32 %s12, 2
        // Predicated region
        $region48: #{tpu_custom_call.1} parent=46 // pred_check
          %p790 = pneg %p150
        $region49: #{tpu_custom_call.1} parent=46 // pred_check_branch
          %792 = sbr.rel (%p790) target = $region51
        $region50: #{tpu_custom_call.1} parent=46 // pred_region
          %s793 = sand.u32 %s135, 1
          %s794 = scalar_lea.sflag [#allocation3], %s793
          %s795 = sand.u32 %s135, 1
          %s796 = smul.addr %s795, 128
          %s797 = scalar_lea.vmem [#allocation2], %s796
          %798 = dma.done %s794, 2048
        $region51: #{tpu_custom_call.1} parent=46 // pred_fallthru
          _
      $region47: #{tpu_custom_call.1} parent=5 // pred_fallthru
        _
    $region6: #{tpu_custom_call.1} parent=1 // loop_footer
      %s16 = sadd.s32 1, %s12
    $region7: #{tpu_custom_call.1} parent=1 // loop_footer_branch
      %11 = sbr.rel target = $region3
    $region8: #{tpu_custom_call.1} parent=1 // loop_exit
      _
    %799 = vsyncpa [#allocation3], 1
    %s800 = scalar_lea.sflag [#allocation3], 1
    %801 = vsyncpa %s800, 1

</llo_original>
